<compile_context>
chip_gen: v7x
topology: tpu7x:2x2x1
jax: 0.10.0
libtpu: 0.0.40
codegen_flags: <defaults>
</compile_context>

<pallas_src>
import functools

import jax
import jax.numpy as jnp
from jax.experimental import pallas as pl
from jax.experimental.pallas import tpu as pltpu


def _round_up(x, m):
    return ((x + m - 1) // m) * m


def _fwd_stats_kernel(x_ref, w1_ref, b1_ref, w2_ref, b2_ref, w3_ref, b3_ref,
                      z_ref, m_ref, s_ref, *, tile, n_valid, tiles_per_core):
    """One batch tile (transposed layout):
       z = W3 relu(W2 relu(W1 x + b1) + b2) + b3            (logits, (C, tile))
    plus per-core online (max, sum-exp) accumulation over the batch (dim=0)
    axis for the log_softmax."""
    c = pl.program_id(0)          # TensorCore split (parallel)
    t = pl.program_id(1)          # batch tile within this core (arbitrary)

    # ---- layer 1 on the VPU: K = F = 4 is far too shallow for the MXU ------
    xv = x_ref[...]               # (F, tile)  f32, batch on lanes
    w1 = w1_ref[...]              # (H, F)     f32
    f_dim = xv.shape[0]
    h = b1_ref[...] + w1[:, 0:1] * xv[0:1, :]          # (H,1)*(1,tile) -> (H,tile)
    for k in range(1, f_dim):                          # F=4: fully unrolled FMAs
        h = h + w1[:, k:k + 1] * xv[k:k + 1, :]
    h = jnp.maximum(h, 0.0).astype(w2_ref.dtype)

    # ---- layer 2 on the MXU: (H, H) @ (H, tile) -----------------------------
    h = jnp.dot(w2_ref[...], h, preferred_element_type=jnp.float32)
    h = jnp.maximum(h + b2_ref[...], 0.0).astype(w3_ref.dtype)

    # ---- output layer on the MXU: (C, H) @ (H, tile) ------------------------
    z = jnp.dot(w3_ref[...], h, preferred_element_type=jnp.float32) + b3_ref[...]
    z_ref[...] = z                # (C, tile) — lane-dense, unmasked stores

    # ---- online per-class (max, sum-exp) over the batch axis ----------------
    # Mask padded batch columns so they do not contaminate the dim=0 softmax.
    start = (c * tiles_per_core + t) * tile
    col = jax.lax.broadcasted_iota(jnp.int32, z.shape, 1) + start
    z_m = jnp.where(col < n_valid, z, -jnp.inf)

    @pl.when(t == 0)
    def _():
        m_ref[...] = jnp.full(m_ref.shape, -jnp.inf, m_ref.dtype)
        s_ref[...] = jnp.zeros(s_ref.shape, s_ref.dtype)

    m_old = m_ref[...][0]                                   # (C, 1)
    s_old = s_ref[...][0]                                   # (C, 1)
    m_new = jnp.maximum(m_old, jnp.max(z_m, axis=1, keepdims=True))
    # Guard: a core whose tiles are ALL padding keeps m_new == -inf; without
    # the substitution exp(-inf - -inf) = NaN.  With it, s stays exactly 0.
    m_safe = jnp.where(m_new == -jnp.inf, 0.0, m_new)
    s_new = (s_old * jnp.exp(m_old - m_safe)
             + jnp.sum(jnp.exp(z_m - m_safe), axis=1, keepdims=True))
    m_ref[...] = m_new[None]
    s_ref[...] = s_new[None]


def classifier_mlp_forward(x, params, *, tile=8192, use_bf16=False):
    """x: (N, in_dim + 2) float32.  params in PyTorch nn.Linear layout:
    (w1 (H,F), b1 (H,), w2 (H,H), b2 (H,), w3 (C,H), b3 (C,)).
    Returns log_softmax(MLP(x), dim=0) with shape (N, C)."""
    w1, b1, w2, b2, w3, b3 = params
    n, f = x.shape
    hidden = w1.shape[0]
    out_dim = w3.shape[0]

    # --- batch tile: always a multiple of 128, never larger than needed ------
    tile = max(128, _round_up(tile, 128))
    tile = min(tile, _round_up(n, 128))
    num_tiles = -(-n // tile)

    # Leading "parallel" grid axis of size 2 shards the batch tiles across the
    # two TensorCores on v7x; on 1-TC chips it is just two sequential outer
    # iterations (perf-neutral), so it is not gated on chip version.
    num_cores = 2 if num_tiles >= 2 else 1
    tiles_per_core = -(-num_tiles // num_cores)
    n_pad = num_cores * tiles_per_core * tile

    # --- input preprocessing: one fused transpose+pad pass over x ------------
    # x stays f32 (no input precision loss even on the bf16 MXU path; layer 1
    # runs on the VPU in f32).
    xt = jnp.pad(x.astype(jnp.float32).T, ((0, 0), (0, n_pad - n)))   # (F, n_pad)

    # bf16 MXU operands help on ALL chips (v5e's MXU is native bf16 as well);
    # biases / accumulation / VPU+EUP math stay f32.
    mxu_dtype = jnp.bfloat16 if use_bf16 else jnp.float32
    w1f = w1.astype(jnp.float32)                       # layer 1 is VPU / f32
    w2m = w2.astype(mxu_dtype)
    w3m = w3.astype(mxu_dtype)
    b1c = b1.reshape(hidden, 1).astype(jnp.float32)
    b2c = b2.reshape(hidden, 1).astype(jnp.float32)
    b3c = b3.reshape(out_dim, 1).astype(jnp.float32)

    const = lambda c, t: (0, 0)                        # weights stay VMEM-resident
    batch_blk = lambda c, t: (0, c * tiles_per_core + t)
    stats_blk = lambda c, t: (c, 0, 0)

    flops = 2 * n_pad * hidden * (f + hidden + out_dim)
    bytes_accessed = 4 * (n_pad * f + n_pad * out_dim
                          + hidden * (f + hidden + 2) + out_dim * (hidden + 1)
                          + 2 * num_cores * out_dim)

    z, m, s = pl.pallas_call(
        functools.partial(_fwd_stats_kernel, tile=tile, n_valid=n,
                          tiles_per_core=tiles_per_core),
        grid=(num_cores, tiles_per_core),
        in_specs=[
            pl.BlockSpec((f, tile), batch_blk),        # x^T tile (F, tile)
            pl.BlockSpec(w1f.shape, const),
            pl.BlockSpec(b1c.shape, const),
            pl.BlockSpec(w2m.shape, const),
            pl.BlockSpec(b2c.shape, const),
            pl.BlockSpec(w3m.shape, const),
            pl.BlockSpec(b3c.shape, const),
        ],
        out_specs=[
            pl.BlockSpec((out_dim, tile), batch_blk),  # z (logits, transposed)
            pl.BlockSpec((1, out_dim, 1), stats_blk),  # per-core running max
            pl.BlockSpec((1, out_dim, 1), stats_blk),  # per-core running sum-exp
        ],
        out_shape=[
            jax.ShapeDtypeStruct((out_dim, n_pad), jnp.float32),
            jax.ShapeDtypeStruct((num_cores, out_dim, 1), jnp.float32),
            jax.ShapeDtypeStruct((num_cores, out_dim, 1), jnp.float32),
        ],
        compiler_params=pltpu.CompilerParams(
            dimension_semantics=("parallel", "arbitrary"),
            vmem_limit_bytes=32 * 1024 * 1024),
        cost_estimate=pl.CostEstimate(flops=flops,
                                      transcendentals=n_pad * out_dim,
                                      bytes_accessed=bytes_accessed),
    )(xt, w1f, b1c, w2m, b2c, w3m, b3c)

    # --- finalize (fused by XLA into one read-of-z / write-of-out pass) ------
    # Combine the per-core partial (max, sum-exp) pairs, then normalize.
    m_g = jnp.max(m, axis=0)                                   # (C, 1)
    s_g = jnp.sum(s * jnp.exp(m - m_g), axis=0)                # (C, 1)
    lse = m_g + jnp.log(s_g)                                   # (C, 1)
    return (z[:, :n] - lse).T                                  # (N, C)


def init_params(key, in_dim, hidden_dim, out_dim):
    """PyTorch nn.Linear layout: W (out_features, in_features), b (out_features,),
    init U(-1/sqrt(fan_in), 1/sqrt(fan_in))."""
    feats = in_dim + 2
    ks = jax.random.split(key, 6)

    def lin(kw, kb, fan_in, fan_out):
        bound = 1.0 / jnp.sqrt(jnp.float32(fan_in))
        w = jax.random.uniform(kw, (fan_out, fan_in), jnp.float32, -bound, bound)
        b = jax.random.uniform(kb, (fan_out,), jnp.float32, -bound, bound)
        return w, b

    w1, b1 = lin(ks[0], ks[1], feats, hidden_dim)
    w2, b2 = lin(ks[2], ks[3], hidden_dim, hidden_dim)
    w3, b3 = lin(ks[4], ks[5], hidden_dim, out_dim)
    return (w1, b1, w2, b2, w3, b3)


def reference_forward(x, params):
    w1, b1, w2, b2, w3, b3 = params
    h = jnp.maximum(x @ w1.T + b1, 0.0)
    h = jnp.maximum(h @ w2.T + b2, 0.0)
    logits = h @ w3.T + b3
    return jax.nn.log_softmax(logits, axis=0)


if __name__ == "__main__":
    key = jax.random.PRNGKey(0)
    k_x, k_p = jax.random.split(key)

    in_dim, hidden_dim, out_dim = 2, 32, 4
    batch = 8

    # Input is (batch, in_dim + 2): the script's x.reshape(-1, 2)-style 2D
    # features with the +2 augmentation implied by h1's in_features.
    x = jax.random.normal(k_x, (batch, in_dim + 2), dtype=jnp.float32)
    params = init_params(k_p, in_dim, hidden_dim, out_dim)

    out = jax.block_until_ready(classifier_mlp_forward(x, params))
    ref = reference_forward(x, params)
    assert out.shape == (batch, out_dim)
    assert jnp.allclose(out, ref, atol=1e-4, rtol=1e-4), \
        float(jnp.max(jnp.abs(out - ref)))

    # Multi-tile path: exercises the 2-way core split, the cross-tile online
    # softmax stats, masked padding columns and an all-padding trailing tile.
    x_big = jax.random.normal(k_x, (300, in_dim + 2), dtype=jnp.float32)
    out_big = jax.block_until_ready(classifier_mlp_forward(x_big, params, tile=128))
    ref_big = reference_forward(x_big, params)
    assert jnp.allclose(out_big, ref_big, atol=1e-4, rtol=1e-4), \
        float(jnp.max(jnp.abs(out_big - ref_big)))

    # Tile-rounding fix: a non-128-multiple user tile must still lower & match.
    out_odd = jax.block_until_ready(classifier_mlp_forward(x_big, params, tile=200))
    assert jnp.allclose(out_odd, ref_big, atol=1e-4, rtol=1e-4), \
        float(jnp.max(jnp.abs(out_odd - ref_big)))

    # bf16 MXU-operand fast path (all chips); x / layer 1 stay f32, matmul
    # operands are bf16 with f32 accumulation -> looser tolerance.
    out_bf16 = jax.block_until_ready(
        classifier_mlp_forward(x_big, params, tile=128, use_bf16=True))
    assert jnp.allclose(out_bf16, ref_big, atol=1e-1, rtol=1e-1), \
        float(jnp.max(jnp.abs(out_bf16 - ref_big)))

    print("KERNEL_OK")
</pallas_src>

<mosaic_0001>
module attributes {stable_mosaic.version = 11 : i64} {
  func.func @_fwd_stats_kernel(%arg0: i32, %arg1: i32, %arg2: memref<4x128xf32, #tpu.memory_space<vmem>>, %arg3: memref<32x4xf32, #tpu.memory_space<vmem>>, %arg4: memref<32x1xf32, #tpu.memory_space<vmem>>, %arg5: memref<32x32xf32, #tpu.memory_space<vmem>>, %arg6: memref<32x1xf32, #tpu.memory_space<vmem>>, %arg7: memref<4x32xf32, #tpu.memory_space<vmem>>, %arg8: memref<4x1xf32, #tpu.memory_space<vmem>>, %arg9: memref<4x128xf32, #tpu.memory_space<vmem>>, %arg10: memref<1x4x1xf32, #tpu.memory_space<vmem>>, %arg11: memref<1x4x1xf32, #tpu.memory_space<vmem>>) attributes {dimension_semantics = [#tpu.dimension_semantics<parallel>, #tpu.dimension_semantics<arbitrary>], iteration_bounds = array<i64: 1, 1>, scalar_prefetch = 0 : i64, scratch_operands = 0 : i64, tpu.core_type = #tpu.core_type<tc>, window_params = [{transform_indices = @transform_0, window_bounds = array<i64: 4, 128>}, {pipeline_mode = #tpu.pipeline_mode<synchronous>, transform_indices = @transform_1, window_bounds = array<i64: 32, 4>}, {pipeline_mode = #tpu.pipeline_mode<synchronous>, transform_indices = @transform_2, window_bounds = array<i64: 32, 1>}, {pipeline_mode = #tpu.pipeline_mode<synchronous>, transform_indices = @transform_3, window_bounds = array<i64: 32, 32>}, {pipeline_mode = #tpu.pipeline_mode<synchronous>, transform_indices = @transform_4, window_bounds = array<i64: 32, 1>}, {pipeline_mode = #tpu.pipeline_mode<synchronous>, transform_indices = @transform_5, window_bounds = array<i64: 4, 32>}, {pipeline_mode = #tpu.pipeline_mode<synchronous>, transform_indices = @transform_6, window_bounds = array<i64: 4, 1>}, {transform_indices = @transform_7, window_bounds = array<i64: 4, 128>}, {transform_indices = @transform_8, window_bounds = array<i64: 1, 4, 1>}, {transform_indices = @transform_9, window_bounds = array<i64: 1, 4, 1>}]} {
    %c0 = arith.constant 0 : index
    %c0_0 = arith.constant 0 : index
    %0 = vector.load %arg2[%c0, %c0_0] : memref<4x128xf32, #tpu.memory_space<vmem>>, vector<4x128xf32>
    %c0_1 = arith.constant 0 : index
    %c0_2 = arith.constant 0 : index
    %1 = vector.load %arg3[%c0_1, %c0_2] : memref<32x4xf32, #tpu.memory_space<vmem>>, vector<32x4xf32>
    %c0_3 = arith.constant 0 : index
    %c0_4 = arith.constant 0 : index
    %2 = vector.load %arg4[%c0_3, %c0_4] : memref<32x1xf32, #tpu.memory_space<vmem>>, vector<32x1xf32>
    %3 = vector.extract_strided_slice %1 {offsets = [0, 0], sizes = [32, 1], strides = [1, 1]} : vector<32x4xf32> to vector<32x1xf32>
    %4 = vector.extract_strided_slice %0 {offsets = [0, 0], sizes = [1, 128], strides = [1, 1]} : vector<4x128xf32> to vector<1x128xf32>
    %5 = vector.broadcast %3 : vector<32x1xf32> to vector<32x128xf32>
    %6 = vector.broadcast %4 : vector<1x128xf32> to vector<32x128xf32>
    %7 = arith.mulf %5, %6 : vector<32x128xf32>
    %8 = vector.broadcast %2 : vector<32x1xf32> to vector<32x128xf32>
    %9 = arith.addf %8, %7 : vector<32x128xf32>
    %10 = vector.extract_strided_slice %1 {offsets = [0, 1], sizes = [32, 1], strides = [1, 1]} : vector<32x4xf32> to vector<32x1xf32>
    %11 = vector.extract_strided_slice %0 {offsets = [1, 0], sizes = [1, 128], strides = [1, 1]} : vector<4x128xf32> to vector<1x128xf32>
    %12 = vector.broadcast %10 : vector<32x1xf32> to vector<32x128xf32>
    %13 = vector.broadcast %11 : vector<1x128xf32> to vector<32x128xf32>
    %14 = arith.mulf %12, %13 : vector<32x128xf32>
    %15 = arith.addf %9, %14 : vector<32x128xf32>
    %16 = vector.extract_strided_slice %1 {offsets = [0, 2], sizes = [32, 1], strides = [1, 1]} : vector<32x4xf32> to vector<32x1xf32>
    %17 = vector.extract_strided_slice %0 {offsets = [2, 0], sizes = [1, 128], strides = [1, 1]} : vector<4x128xf32> to vector<1x128xf32>
    %18 = vector.broadcast %16 : vector<32x1xf32> to vector<32x128xf32>
    %19 = vector.broadcast %17 : vector<1x128xf32> to vector<32x128xf32>
    %20 = arith.mulf %18, %19 : vector<32x128xf32>
    %21 = arith.addf %15, %20 : vector<32x128xf32>
    %22 = vector.extract_strided_slice %1 {offsets = [0, 3], sizes = [32, 1], strides = [1, 1]} : vector<32x4xf32> to vector<32x1xf32>
    %23 = vector.extract_strided_slice %0 {offsets = [3, 0], sizes = [1, 128], strides = [1, 1]} : vector<4x128xf32> to vector<1x128xf32>
    %24 = vector.broadcast %22 : vector<32x1xf32> to vector<32x128xf32>
    %25 = vector.broadcast %23 : vector<1x128xf32> to vector<32x128xf32>
    %26 = arith.mulf %24, %25 : vector<32x128xf32>
    %27 = arith.addf %21, %26 : vector<32x128xf32>
    %cst = arith.constant 0.000000e+00 : f32
    %28 = vector.broadcast %cst : f32 to vector<32x128xf32>
    %29 = arith.maximumf %27, %28 : vector<32x128xf32>
    %c0_5 = arith.constant 0 : index
    %c0_6 = arith.constant 0 : index
    %30 = vector.load %arg5[%c0_5, %c0_6] : memref<32x32xf32, #tpu.memory_space<vmem>>, vector<32x32xf32>
    %cst_7 = arith.constant dense<0.000000e+00> : vector<32x128xf32>
    %31 = tpu.matmul %30, %29, %cst_7 {dimension_numbers = #tpu.dot_dimension_numbers<[1], [0], [0], [1], [0, 0, 1, 1], [], []>} : vector<32x32xf32>, vector<32x128xf32>, vector<32x128xf32> -> vector<32x128xf32>
    %c0_8 = arith.constant 0 : index
    %c0_9 = arith.constant 0 : index
    %32 = vector.load %arg6[%c0_8, %c0_9] : memref<32x1xf32, #tpu.memory_space<vmem>>, vector<32x1xf32>
    %33 = vector.broadcast %32 : vector<32x1xf32> to vector<32x128xf32>
    %34 = arith.addf %31, %33 : vector<32x128xf32>
    %cst_10 = arith.constant 0.000000e+00 : f32
    %35 = vector.broadcast %cst_10 : f32 to vector<32x128xf32>
    %36 = arith.maximumf %34, %35 : vector<32x128xf32>
    %c0_11 = arith.constant 0 : index
    %c0_12 = arith.constant 0 : index
    %37 = vector.load %arg7[%c0_11, %c0_12] : memref<4x32xf32, #tpu.memory_space<vmem>>, vector<4x32xf32>
    %cst_13 = arith.constant dense<0.000000e+00> : vector<4x128xf32>
    %38 = tpu.matmul %37, %36, %cst_13 {dimension_numbers = #tpu.dot_dimension_numbers<[1], [0], [0], [1], [0, 0, 1, 1], [], []>} : vector<4x32xf32>, vector<32x128xf32>, vector<4x128xf32> -> vector<4x128xf32>
    %c0_14 = arith.constant 0 : index
    %c0_15 = arith.constant 0 : index
    %39 = vector.load %arg8[%c0_14, %c0_15] : memref<4x1xf32, #tpu.memory_space<vmem>>, vector<4x1xf32>
    %40 = vector.broadcast %39 : vector<4x1xf32> to vector<4x128xf32>
    %41 = arith.addf %38, %40 : vector<4x128xf32>
    %c0_16 = arith.constant 0 : index
    %c0_17 = arith.constant 0 : index
    %42 = vector.load %arg9[%c0_16, %c0_17] : memref<4x128xf32, #tpu.memory_space<vmem>>, vector<4x128xf32>
    tpu.vector_store %arg9[%c0_16, %c0_17], %41 {strides = array<i32>} : memref<4x128xf32, #tpu.memory_space<vmem>>, vector<4x128xf32>,
    %c1_i32 = arith.constant 1 : i32
    %43 = arith.muli %arg0, %c1_i32 : i32
    %44 = arith.addi %43, %arg1 : i32
    %c128_i32 = arith.constant 128 : i32
    %45 = arith.muli %44, %c128_i32 : i32
    %46 = tpu.iota {dimensions = array<i32: 1>} : vector<4x128xi32>
    %47 = vector.broadcast %45 : i32 to vector<4x128xi32>
    %48 = arith.addi %46, %47 : vector<4x128xi32>
    %c8_i32 = arith.constant 8 : i32
    %49 = vector.broadcast %c8_i32 : i32 to vector<4x128xi32>
    %50 = arith.cmpi slt, %48, %49 : vector<4x128xi32>
    %cst_18 = arith.constant 0xFF800000 : f32
    %51 = vector.broadcast %cst_18 : f32 to vector<4x128xf32>
    %52 = arith.select %50, %41, %51 : vector<4x128xi1>, vector<4x128xf32>
    %c0_i32 = arith.constant 0 : i32
    %53 = arith.cmpi eq, %arg1, %c0_i32 : i32
    %54 = arith.extui %53 : i1 to i32
    %c0_i32_19 = arith.constant 0 : i32
    %55 = arith.cmpi ne, %54, %c0_i32_19 : i32
    scf.if %55 {
      %cst_36 = arith.constant 0xFF800000 : f32
      %80 = vector.broadcast %cst_36 : f32 to vector<1x4x1xf32>
      %c0_37 = arith.constant 0 : index
      %c0_38 = arith.constant 0 : index
      %c0_39 = arith.constant 0 : index
      %81 = vector.load %arg10[%c0_37, %c0_38, %c0_39] : memref<1x4x1xf32, #tpu.memory_space<vmem>>, vector<1x4x1xf32>
      tpu.vector_store %arg10[%c0_37, %c0_38, %c0_39], %80 {strides = array<i32>} : memref<1x4x1xf32, #tpu.memory_space<vmem>>, vector<1x4x1xf32>,
      %cst_40 = arith.constant 0.000000e+00 : f32
      %82 = vector.broadcast %cst_40 : f32 to vector<1x4x1xf32>
      %c0_41 = arith.constant 0 : index
      %c0_42 = arith.constant 0 : index
      %c0_43 = arith.constant 0 : index
      %83 = vector.load %arg11[%c0_41, %c0_42, %c0_43] : memref<1x4x1xf32, #tpu.memory_space<vmem>>, vector<1x4x1xf32>
      tpu.vector_store %arg11[%c0_41, %c0_42, %c0_43], %82 {strides = array<i32>} : memref<1x4x1xf32, #tpu.memory_space<vmem>>, vector<1x4x1xf32>,
    } else {
    }
    %c0_20 = arith.constant 0 : index
    %c0_21 = arith.constant 0 : index
    %c0_22 = arith.constant 0 : index
    %56 = vector.load %arg10[%c0_20, %c0_21, %c0_22] : memref<1x4x1xf32, #tpu.memory_space<vmem>>, vector<1x4x1xf32>
    %57 = vector.shape_cast %56 : vector<1x4x1xf32> to vector<4x1xf32>
    %c0_23 = arith.constant 0 : index
    %c0_24 = arith.constant 0 : index
    %c0_25 = arith.constant 0 : index
    %58 = vector.load %arg11[%c0_23, %c0_24, %c0_25] : memref<1x4x1xf32, #tpu.memory_space<vmem>>, vector<1x4x1xf32>
    %59 = vector.shape_cast %58 : vector<1x4x1xf32> to vector<4x1xf32>
    %cst_26 = arith.constant dense<0xFF800000> : vector<4xf32>
    %60 = vector.multi_reduction <maximumf>, %52, %cst_26 [1] : vector<4x128xf32> to vector<4xf32>
    %61 = vector.shape_cast %60 : vector<4xf32> to vector<4x1xf32>
    %62 = arith.maximumf %57, %61 : vector<4x1xf32>
    %cst_27 = arith.constant 0xFF800000 : f32
    %63 = vector.broadcast %cst_27 : f32 to vector<4x1xf32>
    %64 = arith.cmpf oeq, %62, %63 : vector<4x1xf32>
    %cst_28 = arith.constant 0.000000e+00 : f32
    %65 = vector.broadcast %cst_28 : f32 to vector<4x1xf32>
    %66 = arith.select %64, %65, %62 : vector<4x1xi1>, vector<4x1xf32>
    %67 = arith.subf %57, %66 : vector<4x1xf32>
    %68 = math.exp %67 : vector<4x1xf32>
    %69 = arith.mulf %59, %68 : vector<4x1xf32>
    %70 = vector.broadcast %66 : vector<4x1xf32> to vector<4x128xf32>
    %71 = arith.subf %52, %70 : vector<4x128xf32>
    %72 = math.exp %71 : vector<4x128xf32>
    %cst_29 = arith.constant dense<0.000000e+00> : vector<4xf32>
    %73 = vector.multi_reduction <add>, %72, %cst_29 [1] : vector<4x128xf32> to vector<4xf32>
    %74 = vector.shape_cast %73 : vector<4xf32> to vector<4x1xf32>
    %75 = arith.addf %69, %74 : vector<4x1xf32>
    %76 = vector.shape_cast %62 : vector<4x1xf32> to vector<1x4x1xf32>
    %c0_30 = arith.constant 0 : index
    %c0_31 = arith.constant 0 : index
    %c0_32 = arith.constant 0 : index
    %77 = vector.load %arg10[%c0_30, %c0_31, %c0_32] : memref<1x4x1xf32, #tpu.memory_space<vmem>>, vector<1x4x1xf32>
    tpu.vector_store %arg10[%c0_30, %c0_31, %c0_32], %76 {strides = array<i32>} : memref<1x4x1xf32, #tpu.memory_space<vmem>>, vector<1x4x1xf32>,
    %78 = vector.shape_cast %75 : vector<4x1xf32> to vector<1x4x1xf32>
    %c0_33 = arith.constant 0 : index
    %c0_34 = arith.constant 0 : index
    %c0_35 = arith.constant 0 : index
    %79 = vector.load %arg11[%c0_33, %c0_34, %c0_35] : memref<1x4x1xf32, #tpu.memory_space<vmem>>, vector<1x4x1xf32>
    tpu.vector_store %arg11[%c0_33, %c0_34, %c0_35], %78 {strides = array<i32>} : memref<1x4x1xf32, #tpu.memory_space<vmem>>, vector<1x4x1xf32>,
    return
  }
  func.func @transform_0(%arg0: i32, %arg1: i32) -> (i32, i32) {
    %c1_i32 = arith.constant 1 : i32
    %0 = arith.muli %arg0, %c1_i32 : i32
    %1 = arith.addi %0, %arg1 : i32
    %c0_i32 = arith.constant 0 : i32
    %c0_i32_0 = arith.constant 0 : i32
    return %c0_i32, %1 : i32, i32
  }
  func.func @transform_1(%arg0: i32, %arg1: i32) -> (i32, i32) {
    %c0_i32 = arith.constant 0 : i32
    %c0_i32_0 = arith.constant 0 : i32
    %c0_i32_1 = arith.constant 0 : i32
    return %c0_i32, %c0_i32_0 : i32, i32
  }
  func.func @transform_2(%arg0: i32, %arg1: i32) -> (i32, i32) {
    %c0_i32 = arith.constant 0 : i32
    %c0_i32_0 = arith.constant 0 : i32
    %c0_i32_1 = arith.constant 0 : i32
    return %c0_i32, %c0_i32_0 : i32, i32
  }
  func.func @transform_3(%arg0: i32, %arg1: i32) -> (i32, i32) {
    %c0_i32 = arith.constant 0 : i32
    %c0_i32_0 = arith.constant 0 : i32
    %c0_i32_1 = arith.constant 0 : i32
    return %c0_i32, %c0_i32_0 : i32, i32
  }
  func.func @transform_4(%arg0: i32, %arg1: i32) -> (i32, i32) {
    %c0_i32 = arith.constant 0 : i32
    %c0_i32_0 = arith.constant 0 : i32
    %c0_i32_1 = arith.constant 0 : i32
    return %c0_i32, %c0_i32_0 : i32, i32
  }
  func.func @transform_5(%arg0: i32, %arg1: i32) -> (i32, i32) {
    %c0_i32 = arith.constant 0 : i32
    %c0_i32_0 = arith.constant 0 : i32
    %c0_i32_1 = arith.constant 0 : i32
    return %c0_i32, %c0_i32_0 : i32, i32
  }
  func.func @transform_6(%arg0: i32, %arg1: i32) -> (i32, i32) {
    %c0_i32 = arith.constant 0 : i32
    %c0_i32_0 = arith.constant 0 : i32
    %c0_i32_1 = arith.constant 0 : i32
    return %c0_i32, %c0_i32_0 : i32, i32
  }
  func.func @transform_7(%arg0: i32, %arg1: i32) -> (i32, i32) {
    %c1_i32 = arith.constant 1 : i32
    %0 = arith.muli %arg0, %c1_i32 : i32
    %1 = arith.addi %0, %arg1 : i32
    %c0_i32 = arith.constant 0 : i32
    %c0_i32_0 = arith.constant 0 : i32
    return %c0_i32, %1 : i32, i32
  }
  func.func @transform_8(%arg0: i32, %arg1: i32) -> (i32, i32, i32) {
    %c0_i32 = arith.constant 0 : i32
    %c0_i32_0 = arith.constant 0 : i32
    %c0_i32_1 = arith.constant 0 : i32
    return %arg0, %c0_i32, %c0_i32_0 : i32, i32, i32
  }
  func.func @transform_9(%arg0: i32, %arg1: i32) -> (i32, i32, i32) {
    %c0_i32 = arith.constant 0 : i32
    %c0_i32_0 = arith.constant 0 : i32
    %c0_i32_1 = arith.constant 0 : i32
    return %arg0, %c0_i32, %c0_i32_0 : i32, i32, i32
  }
}

</mosaic_0001>

<llo_original>
// kernel: tpu_custom_call.1
$region0: #{tpu_custom_call.1}
  #allocation0 [shape = 'u32[]', space=smem, size = 0x4, offset = 0x4, fixed_abs, tag = 'smem constant byte address 0x4 - core index']
  #allocation1 [shape = 'u32[144,128]{1,0:T(1,128)}', space=vmem, size = 0x12000, scoped, tag = 'internal scratch']
  %s0 = inlined_call_operand.vmem [shape: f32[4,128], index: 0, kind: input, shape index: {}]
  %s1 = inlined_call_operand.vmem [shape: f32[32,4], index: 1, kind: input, shape index: {}]
  %s2 = inlined_call_operand.vmem [shape: f32[32,1], index: 2, kind: input, shape index: {}]
  %s3 = inlined_call_operand.vmem [shape: f32[32,32], index: 3, kind: input, shape index: {}]
  %s4 = inlined_call_operand.vmem [shape: f32[32,1], index: 4, kind: input, shape index: {}]
  %s5 = inlined_call_operand.vmem [shape: f32[4,32], index: 5, kind: input, shape index: {}]
  %s6 = inlined_call_operand.vmem [shape: f32[4,1], index: 6, kind: input, shape index: {}]
  %s7 = inlined_call_operand.hbm [shape: f32[4,128], index: 7, kind: output, shape index: {0}]
  %s8 = inlined_call_operand.vmem [shape: f32[1,4,1], index: 8, kind: output, shape index: {1}]
  %s9 = inlined_call_operand.vmem [shape: f32[1,4,1], index: 9, kind: output, shape index: {2}]
  %10 = xla_tuple %s7, %s8, %s9
  %s11 = sld [smem:[#allocation0]]
  $region58: #{tpu_custom_call.1} parent=0
    _
  %s13 = ssub.s32 1, %s11
  %s14 = scalar_select 0, %s13, %s11
  $region1: #{tpu_custom_call.1} parent=0
    #allocation2 [shape = 'u8[2048]{0}', space=vmem, size = 0x800, scoped, tag = 'output window, operand 0, single buffered']
    #allocation3 [shape = 's32[1]{0}', space=sflag, size = 0x4, scoped, tag = 'scoped memory for tpu_custom_call.1']
    %15 = vsyncpa [#allocation3], 0
    // Predicated region
    $region2: #{tpu_custom_call.1} parent=1 // pred_check
      _
    $region3: #{tpu_custom_call.1} parent=1 // pred_check_branch
      %17 = sbr.rel (0) target = $region5
    $region4: #{tpu_custom_call.1} parent=1 // pred_region
      %s18 = sadd.s32 0, 0
      %p19 = scmp.lt.s32.totalorder %s18, 0
      %s20 = scalar_select %p19, %s18, 0
      %s21 = smul.addr %s20, 4
      %s22 = scalar_lea.vmem %s0, %s21
      %s23 = sadd.s32 0, 0
    $region5: #{tpu_custom_call.1} parent=1 // pred_fallthru
      _
    // Predicated region
    $region6: #{tpu_custom_call.1} parent=1 // pred_check
      _
    $region7: #{tpu_custom_call.1} parent=1 // pred_check_branch
      %25 = sbr.rel (0) target = $region9
    $region8: #{tpu_custom_call.1} parent=1 // pred_region
      _
    $region9: #{tpu_custom_call.1} parent=1 // pred_fallthru
      _
    // Predicated region
    $region10: #{tpu_custom_call.1} parent=1 // pred_check
      _
    $region11: #{tpu_custom_call.1} parent=1 // pred_check_branch
      %27 = sbr.rel (0) target = $region13
    $region12: #{tpu_custom_call.1} parent=1 // pred_region
      _
    $region13: #{tpu_custom_call.1} parent=1 // pred_fallthru
      _
    // Predicated region
    $region14: #{tpu_custom_call.1} parent=1 // pred_check
      _
    $region15: #{tpu_custom_call.1} parent=1 // pred_check_branch
      %29 = sbr.rel (0) target = $region17
    $region16: #{tpu_custom_call.1} parent=1 // pred_region
      _
    $region17: #{tpu_custom_call.1} parent=1 // pred_fallthru
      _
    // Predicated region
    $region18: #{tpu_custom_call.1} parent=1 // pred_check
      _
    $region19: #{tpu_custom_call.1} parent=1 // pred_check_branch
      %31 = sbr.rel (0) target = $region21
    $region20: #{tpu_custom_call.1} parent=1 // pred_region
      _
    $region21: #{tpu_custom_call.1} parent=1 // pred_fallthru
      _
    // Predicated region
    $region22: #{tpu_custom_call.1} parent=1 // pred_check
      _
    $region23: #{tpu_custom_call.1} parent=1 // pred_check_branch
      %33 = sbr.rel (0) target = $region25
    $region24: #{tpu_custom_call.1} parent=1 // pred_region
      _
    $region25: #{tpu_custom_call.1} parent=1 // pred_fallthru
      _
    // Predicated region
    $region26: #{tpu_custom_call.1} parent=1 // pred_check
      _
    $region27: #{tpu_custom_call.1} parent=1 // pred_check_branch
      %35 = sbr.rel (0) target = $region29
    $region28: #{tpu_custom_call.1} parent=1 // pred_region
      _
    $region29: #{tpu_custom_call.1} parent=1 // pred_fallthru
      _
    %s36 = sadd.s32 0, 0
    %p37 = scmp.lt.s32.totalorder %s36, 0
    %s38 = scalar_select %p37, %s36, 0
    %s39 = smul.addr %s38, 4
    %s40 = scalar_lea.vmem %s0, %s39
    %s41 = sadd.s32 0, 0
    %p42 = scmp.lt.s32.totalorder %s41, 0
    %s43 = scalar_select %p42, %s41, 0
    %s44 = smul.addr %s43, 4
    %s45 = scalar_lea.vmem %s0, %s44
    %s46 = sadd.s32 0, 0
    %s47 = sadd.s32 0, 0
    %v48 = vld [vmem:[%s45] sm:$0xf]
    %v49 = vld [vmem:[%s1] sm:$0xff]
    %v50 = vld [vmem:[%s1 + $0x8] sm:$0xff]
    %v51 = vld [vmem:[%s1 + $0x10] sm:$0xff]
    %v52 = vld [vmem:[%s1 + $0x18] sm:$0xff]
    %v53 = vld [vmem:[%s2] sm:$0xff]
    %v54 = vld [vmem:[%s2 + $0x8] sm:$0xff]
    %v55 = vld [vmem:[%s2 + $0x10] sm:$0xff]
    %v56 = vld [vmem:[%s2 + $0x18] sm:$0xff]
    %58 = vset.pattern.permute.xlu0 0
    %59 = vperm.xlu0 %58, %v49
    %v60 = vpop.permute.xlu0 %59
    %63 = vset.pattern.permute.xlu0 0
    %64 = vperm.xlu0 %63, %v50
    %v65 = vpop.permute.xlu0 %64
    %68 = vset.pattern.permute.xlu0 0
    %69 = vperm.xlu0 %68, %v51
    %v70 = vpop.permute.xlu0 %69
    %73 = vset.pattern.permute.xlu0 0
    %74 = vperm.xlu0 %73, %v52
    %v75 = vpop.permute.xlu0 %74
    %v77 = vlaneseq
    %v78 = vshrl.u32 %v77, 7
    %v79 = vsub.s32 0, %v78
    %v80 = vrot.slane %v48, %v79
    %v81 = vmul.f32 %v60, %v80
    %v82 = vmul.f32 %v65, %v80
    %v83 = vmul.f32 %v70, %v80
    %v84 = vmul.f32 %v75, %v80
    %86 = vset.pattern.permute.xlu0 0
    %87 = vperm.xlu0 %86, %v53
    %v88 = vpop.permute.xlu0 %87
    %91 = vset.pattern.permute.xlu0 0
    %92 = vperm.xlu0 %91, %v54
    %v93 = vpop.permute.xlu0 %92
    %96 = vset.pattern.permute.xlu0 0
    %97 = vperm.xlu0 %96, %v55
    %v98 = vpop.permute.xlu0 %97
    %101 = vset.pattern.permute.xlu0 0
    %102 = vperm.xlu0 %101, %v56
    %v103 = vpop.permute.xlu0 %102
    %v105 = vadd.f32 %v88, %v81
    %v106 = vadd.f32 %v93, %v82
    %v107 = vadd.f32 %v98, %v83
    %v108 = vadd.f32 %v103, %v84
    %109 = vset.pattern.permute.xlu0 1
    %110 = vperm.xlu0 %109, %v49
    %v111 = vpop.permute.xlu0 %110
    %113 = vset.pattern.permute.xlu0 1
    %114 = vperm.xlu0 %113, %v50
    %v115 = vpop.permute.xlu0 %114
    %117 = vset.pattern.permute.xlu0 1
    %118 = vperm.xlu0 %117, %v51
    %v119 = vpop.permute.xlu0 %118
    %121 = vset.pattern.permute.xlu0 1
    %122 = vperm.xlu0 %121, %v52
    %v123 = vpop.permute.xlu0 %122
    %v125 = vlaneseq
    %v126 = vshrl.u32 %v125, 7
    %v127 = vsub.s32 1, %v126
    %v128 = vrot.slane %v48, %v127
    %v129 = vmul.f32 %v111, %v128
    %v130 = vmul.f32 %v115, %v128
    %v131 = vmul.f32 %v119, %v128
    %v132 = vmul.f32 %v123, %v128
    %v133 = vadd.f32 %v105, %v129
    %v134 = vadd.f32 %v106, %v130
    %v135 = vadd.f32 %v107, %v131
    %v136 = vadd.f32 %v108, %v132
    %137 = vset.pattern.permute.xlu0 2
    %138 = vperm.xlu0 %137, %v49
    %v139 = vpop.permute.xlu0 %138
    %141 = vset.pattern.permute.xlu0 2
    %142 = vperm.xlu0 %141, %v50
    %v143 = vpop.permute.xlu0 %142
    %145 = vset.pattern.permute.xlu0 2
    %146 = vperm.xlu0 %145, %v51
    %v147 = vpop.permute.xlu0 %146
    %149 = vset.pattern.permute.xlu0 2
    %150 = vperm.xlu0 %149, %v52
    %v151 = vpop.permute.xlu0 %150
    %v153 = vlaneseq
    %v154 = vshrl.u32 %v153, 7
    %v155 = vsub.s32 2, %v154
    %v156 = vrot.slane %v48, %v155
    %v157 = vmul.f32 %v139, %v156
    %v158 = vmul.f32 %v143, %v156
    %v159 = vmul.f32 %v147, %v156
    %v160 = vmul.f32 %v151, %v156
    %v161 = vadd.f32 %v133, %v157
    %v162 = vadd.f32 %v134, %v158
    %v163 = vadd.f32 %v135, %v159
    %v164 = vadd.f32 %v136, %v160
    %165 = vset.pattern.permute.xlu0 3
    %166 = vperm.xlu0 %165, %v49
    %v167 = vpop.permute.xlu0 %166
    %169 = vset.pattern.permute.xlu0 3
    %170 = vperm.xlu0 %169, %v50
    %v171 = vpop.permute.xlu0 %170
    %173 = vset.pattern.permute.xlu0 3
    %174 = vperm.xlu0 %173, %v51
    %v175 = vpop.permute.xlu0 %174
    %177 = vset.pattern.permute.xlu0 3
    %178 = vperm.xlu0 %177, %v52
    %v179 = vpop.permute.xlu0 %178
    %v181 = vlaneseq
    %v182 = vshrl.u32 %v181, 7
    %v183 = vsub.s32 3, %v182
    %v184 = vrot.slane %v48, %v183
    %v185 = vmul.f32 %v167, %v184
    %v186 = vmul.f32 %v171, %v184
    %v187 = vmul.f32 %v175, %v184
    %v188 = vmul.f32 %v179, %v184
    %v189 = vadd.f32 %v161, %v185
    %v190 = vadd.f32 %v162, %v186
    %v191 = vadd.f32 %v163, %v187
    %v192 = vadd.f32 %v164, %v188
    %v193 = vmax.f32 %v189, 0.0
    %v194 = vmax.f32 %v190, 0.0
    %v195 = vmax.f32 %v191, 0.0
    %v196 = vmax.f32 %v192, 0.0
    %v197 = vld [vmem:[%s3] sm:$0xff]
    %v198 = vld [vmem:[%s3 + $0x8] sm:$0xff]
    %v199 = vld [vmem:[%s3 + $0x10] sm:$0xff]
    %v200 = vld [vmem:[%s3 + $0x18] sm:$0xff]
    %v201 = vld [vmem:[%s4] sm:$0xff]
    %v202 = vld [vmem:[%s4 + $0x8] sm:$0xff]
    %v203 = vld [vmem:[%s4 + $0x10] sm:$0xff]
    %v204 = vld [vmem:[%s4 + $0x18] sm:$0xff]
    %206 = vset.pattern.permute.xlu0 0
    %207 = vperm.xlu0 %206, %v201
    %v208 = vpop.permute.xlu0 %207
    %211 = vset.pattern.permute.xlu0 0
    %212 = vperm.xlu0 %211, %v202
    %v213 = vpop.permute.xlu0 %212
    %216 = vset.pattern.permute.xlu0 0
    %217 = vperm.xlu0 %216, %v203
    %v218 = vpop.permute.xlu0 %217
    %221 = vset.pattern.permute.xlu0 0
    %222 = vperm.xlu0 %221, %v204
    %v223 = vpop.permute.xlu0 %222
    %vm225 = vcmask 261120
    %v227 = vsel %vm225, %v197, 0
    %v230 = vsel %vm225, %v198, 0
    %v233 = vsel %vm225, %v199, 0
    %v236 = vsel %vm225, %v200, 0
    %238 = vmatprep.subr.mxu0 0.0
    %239 = vmatpush1.msra.mxu0 %v193
    %240 = vmatprep.subr.mxu0 0.0
    %241 = vmatpush1.msra.mxu0 %v194
    %242 = vmatprep.subr.mxu0 0.0
    %243 = vmatpush1.msra.mxu0 %v195
    %244 = vmatprep.subr.mxu0 0.0
    %245 = vmatpush1.msra.mxu0 %v196
    %246 = vmatprep.subr.mxu0 0.0
    %247 = vmatpush1.msra.mxu0 0.0
    %248 = vmatprep.subr.mxu0 0.0
    %249 = vmatpush1.msra.mxu0 0.0
    %250 = vmatprep.subr.mxu0 0.0
    %251 = vmatpush1.msra.mxu0 0.0
    %252 = vmatprep.subr.mxu0 0.0
    %253 = vmatpush1.msra.mxu0 0.0
    %254 = vmatprep.subr.mxu0 0.0
    %255 = vmatpush1.msra.mxu0 0.0
    %256 = vmatprep.subr.mxu0 0.0
    %257 = vmatpush1.msra.mxu0 0.0
    %258 = vmatprep.subr.mxu0 0.0
    %259 = vmatpush1.msra.mxu0 0.0
    %260 = vmatprep.subr.mxu0 0.0
    %261 = vmatpush1.msra.mxu0 0.0
    %262 = vmatprep.subr.mxu0 0.0
    %263 = vmatpush1.msra.mxu0 0.0
    %264 = vmatprep.subr.mxu0 0.0
    %265 = vmatpush1.msra.mxu0 0.0
    %266 = vmatprep.subr.mxu0 0.0
    %267 = vmatpush1.msra.mxu0 0.0
    %268 = vmatprep.subr.mxu0 0.0
    %269 = vmatpush1.msra.mxu0 0.0
    %270 = vmatprep.subr.mxu0 0.0
    %271 = vmatpush1.msra.mxu0 0.0
    %272 = vmatprep.subr.mxu0 0.0
    %273 = vmatpush1.msra.mxu0 0.0
    %274 = vmatprep.subr.mxu0 0.0
    %275 = vmatpush1.msra.mxu0 0.0
    %276 = vmatprep.subr.mxu0 0.0
    %277 = vmatpush1.msra.mxu0 0.0
    %278 = vmatprep.subr.mxu0 0.0
    %279 = vmatpush1.msra.mxu0 0.0
    %280 = vmatprep.subr.mxu0 0.0
    %281 = vmatpush1.msra.mxu0 0.0
    %282 = vmatprep.subr.mxu0 0.0
    %283 = vmatpush1.msra.mxu0 0.0
    %284 = vmatprep.subr.mxu0 0.0
    %285 = vmatpush1.msra.mxu0 0.0
    %286 = vmatprep.subr.mxu0 0.0
    %287 = vmatpush1.msra.mxu0 0.0
    %288 = vmatprep.subr.mxu0 0.0
    %289 = vmatpush1.msra.mxu0 0.0
    %290 = vmatprep.subr.mxu0 0.0
    %291 = vmatpush1.msra.mxu0 0.0
    %292 = vmatprep.subr.mxu0 0.0
    %293 = vmatpush1.msra.mxu0 0.0
    %294 = vmatprep.subr.mxu0 0.0
    %295 = vmatpush1.msra.mxu0 0.0
    %296 = vmatprep.subr.mxu0 0.0
    %297 = vmatpush1.msra.mxu0 0.0
    %298 = vmatprep.subr.mxu0 0.0
    %299 = vmatpush1.msra.mxu0 0.0
    %300 = vmatprep.subr.mxu0 0.0
    %301 = vmatpush1.msra.mxu0 0.0
    %302 = vmatprep.mubr.f32.mxu0 0.0
    %303 = vmatmul.mubr.f32.gmra.mrb[0].mxu0 %v227
    %v304 = vpop.f32.mrb[0].mxu0
    %v305 = vadd.f32 %v208, %v304
    %v306 = vpop.f32.mrb[0].mxu0
    %307 = vmatprep.mubr.f32.mxu0 0.0
    %308 = vmatmul.mubr.f32.gmra.mrb[0].mxu0 %v230
    %v309 = vpop.f32.mrb[0].mxu0
    %v310 = vadd.f32 %v213, %v309
    %v311 = vpop.f32.mrb[0].mxu0
    %312 = vmatprep.mubr.f32.mxu0 0.0
    %313 = vmatmul.mubr.f32.gmra.mrb[0].mxu0 %v233
    %v314 = vpop.f32.mrb[0].mxu0
    %v315 = vadd.f32 %v218, %v314
    %v316 = vpop.f32.mrb[0].mxu0
    %317 = vmatprep.mubr.f32.mxu0 0.0
    %318 = vmatmul.mubr.f32.gmra.mrb[0].mxu0 %v236
    %v319 = vpop.f32.mrb[0].mxu0
    %v320 = vadd.f32 %v223, %v319
    %v321 = vpop.f32.mrb[0].mxu0
    %322 = vdwg.mxu0
    %v323 = vmax.f32 %v305, 0.0
    %v324 = vmax.f32 %v310, 0.0
    %v325 = vmax.f32 %v315, 0.0
    %v326 = vmax.f32 %v320, 0.0
    %v327 = vld [vmem:[%s5] sm:$0xf]
    %v328 = vld [vmem:[%s6] sm:$0xf]
    %330 = vset.pattern.permute.xlu0 0
    %331 = vperm.xlu0 %330, %v328
    %v332 = vpop.permute.xlu0 %331
    %v335 = vsel %vm225, %v327, 0
    %337 = vmatprep.subr.mxu0 0.0
    %338 = vmatpush1.msra.mxu0 %v323
    %339 = vmatprep.subr.mxu0 0.0
    %340 = vmatpush1.msra.mxu0 %v324
    %341 = vmatprep.subr.mxu0 0.0
    %342 = vmatpush1.msra.mxu0 %v325
    %343 = vmatprep.subr.mxu0 0.0
    %344 = vmatpush1.msra.mxu0 %v326
    %345 = vmatprep.subr.mxu0 0.0
    %346 = vmatpush1.msra.mxu0 0.0
    %347 = vmatprep.subr.mxu0 0.0
    %348 = vmatpush1.msra.mxu0 0.0
    %349 = vmatprep.subr.mxu0 0.0
    %350 = vmatpush1.msra.mxu0 0.0
    %351 = vmatprep.subr.mxu0 0.0
    %352 = vmatpush1.msra.mxu0 0.0
    %353 = vmatprep.subr.mxu0 0.0
    %354 = vmatpush1.msra.mxu0 0.0
    %355 = vmatprep.subr.mxu0 0.0
    %356 = vmatpush1.msra.mxu0 0.0
    %357 = vmatprep.subr.mxu0 0.0
    %358 = vmatpush1.msra.mxu0 0.0
    %359 = vmatprep.subr.mxu0 0.0
    %360 = vmatpush1.msra.mxu0 0.0
    %361 = vmatprep.subr.mxu0 0.0
    %362 = vmatpush1.msra.mxu0 0.0
    %363 = vmatprep.subr.mxu0 0.0
    %364 = vmatpush1.msra.mxu0 0.0
    %365 = vmatprep.subr.mxu0 0.0
    %366 = vmatpush1.msra.mxu0 0.0
    %367 = vmatprep.subr.mxu0 0.0
    %368 = vmatpush1.msra.mxu0 0.0
    %369 = vmatprep.subr.mxu0 0.0
    %370 = vmatpush1.msra.mxu0 0.0
    %371 = vmatprep.subr.mxu0 0.0
    %372 = vmatpush1.msra.mxu0 0.0
    %373 = vmatprep.subr.mxu0 0.0
    %374 = vmatpush1.msra.mxu0 0.0
    %375 = vmatprep.subr.mxu0 0.0
    %376 = vmatpush1.msra.mxu0 0.0
    %377 = vmatprep.subr.mxu0 0.0
    %378 = vmatpush1.msra.mxu0 0.0
    %379 = vmatprep.subr.mxu0 0.0
    %380 = vmatpush1.msra.mxu0 0.0
    %381 = vmatprep.subr.mxu0 0.0
    %382 = vmatpush1.msra.mxu0 0.0
    %383 = vmatprep.subr.mxu0 0.0
    %384 = vmatpush1.msra.mxu0 0.0
    %385 = vmatprep.subr.mxu0 0.0
    %386 = vmatpush1.msra.mxu0 0.0
    %387 = vmatprep.subr.mxu0 0.0
    %388 = vmatpush1.msra.mxu0 0.0
    %389 = vmatprep.subr.mxu0 0.0
    %390 = vmatpush1.msra.mxu0 0.0
    %391 = vmatprep.subr.mxu0 0.0
    %392 = vmatpush1.msra.mxu0 0.0
    %393 = vmatprep.subr.mxu0 0.0
    %394 = vmatpush1.msra.mxu0 0.0
    %395 = vmatprep.subr.mxu0 0.0
    %396 = vmatpush1.msra.mxu0 0.0
    %397 = vmatprep.subr.mxu0 0.0
    %398 = vmatpush1.msra.mxu0 0.0
    %399 = vmatprep.subr.mxu0 0.0
    %400 = vmatpush1.msra.mxu0 0.0
    %401 = vmatprep.mubr.f32.mxu0 0.0
    %402 = vmatmul.mubr.f32.gmra.mrb[0].mxu0 %v335
    %v403 = vpop.f32.mrb[0].mxu0
    %v404 = vadd.f32 %v332, %v403
    %v405 = vpop.f32.mrb[0].mxu0
    %406 = vdwg.mxu0
    %407 = vst [vmem:[#allocation2] sm:$0xf] %v404
    %s408 = sadd.s32 0, 0
    %s409 = smul.u32 %s408, 128
    %v410 = vlaneseq
    %v411 = vand.u32 %v410, 127
    %v412 = vstv %s409
    %v413 = vadd.s32 %v411, %v412
    %vm414 = vcmp.lt.s32.totalorder %v413, 8
    %v415 = vsel %vm414, %v404, -inf
    %p416 = scmp.eq.s32.totalorder 0, 0
    // Predicated region
    $region30: #{tpu_custom_call.1} parent=1 // pred_check
      %p417 = pneg %p416
    $region31: #{tpu_custom_call.1} parent=1 // pred_check_branch
      %419 = sbr.rel (%p417) target = $region33
    $region32: #{tpu_custom_call.1} parent=1 // pred_region
      %vm420 = vcmask 3072
      %421 = vst.msk [vmem:[%s8] sm:$0xf] %vm420, -inf
      %422 = vst.msk [vmem:[%s9] sm:$0xf] %vm420, 0.0
    $region33: #{tpu_custom_call.1} parent=1 // pred_fallthru
      _
    %v423 = vld [vmem:[%s8] sm:$0xf]
    %v424 = vld [vmem:[%s9] sm:$0xf]
    %vm425 = vcmask 1043456
    %v426 = vsel %vm425, %v415, -inf
    %427 = vmax.xlane.f32.xlu0 %v426
    %v428 = vpop.xlane.xlu0 %427
    %v429 = vmax.f32 %v423, %v428
    %vm430 = vcmp.eq.f32.partialorder %v429, -inf
    %v431 = vsel %vm430, 0.0, %v429
    %v432 = vsub.f32 %v423, %v431
    %v433 = vmul.f32 %v432, 1.442695
    %v434 = vpow.pop %v433
    %v435 = vmul.f32 %v424, %v434
    %437 = vset.pattern.permute.xlu0 0
    %438 = vperm.xlu0 %437, %v431
    %v439 = vpop.permute.xlu0 %438
    %v441 = vsub.f32 %v415, %v439
    %v442 = vmul.f32 %v441, 1.442695
    %v443 = vpow.pop %v442
    %v444 = vsel %vm425, %v443, 0.0
    %445 = vadd.xlane.f32.xlu0 %v444
    %v446 = vpop.xlane.xlu0 %445
    %v447 = vadd.f32 %v435, %v446
    %vm448 = vcmask 3072
    %449 = vst.msk [vmem:[%s8] sm:$0xf] %vm448, %v429
    %450 = vst.msk [vmem:[%s9] sm:$0xf] %vm448, %v447
    // Predicated region
    $region34: #{tpu_custom_call.1} parent=1 // pred_check
      _
    $region35: #{tpu_custom_call.1} parent=1 // pred_check_branch
      %452 = sbr.rel (0) target = $region37
    $region36: #{tpu_custom_call.1} parent=1 // pred_region
      %s453 = sadd.s32 0, 0
      %s455 = ssub.s32 64, 64
      %456 = vsyncadd [#allocation3], %s455
      %s457 = smul.addr %s453, 64
      %s458 = scalar_lea.hbm %s7, %s457
      %s460 = sshll.u32 [#allocation2], 4
      %s461 = int_to_ptr.vmem [resolvable:$true] %s460
      %463 = dma.vmem_to_hbm [thread:$0]  %s461, 64, %s458, [#allocation3]
    $region37: #{tpu_custom_call.1} parent=1 // pred_fallthru
      _
    // Predicated region
    $region38: #{tpu_custom_call.1} parent=1 // pred_check
      _
    $region39: #{tpu_custom_call.1} parent=1 // pred_check_branch
      %465 = sbr.rel (0) target = $region41
    $region40: #{tpu_custom_call.1} parent=1 // pred_region
      _
    $region41: #{tpu_custom_call.1} parent=1 // pred_fallthru
      _
    // Predicated region
    $region42: #{tpu_custom_call.1} parent=1 // pred_check
      _
    $region43: #{tpu_custom_call.1} parent=1 // pred_check_branch
      %467 = sbr.rel (0) target = $region45
    $region44: #{tpu_custom_call.1} parent=1 // pred_region
      _
    $region45: #{tpu_custom_call.1} parent=1 // pred_fallthru
      _
    // Predicated region
    $region46: #{tpu_custom_call.1} parent=1 // pred_check
      _
    $region47: #{tpu_custom_call.1} parent=1 // pred_check_branch
      %469 = sbr.rel (0) target = $region49
    $region48: #{tpu_custom_call.1} parent=1 // pred_region
      %470 = dma.done [#allocation3], 64
    $region49: #{tpu_custom_call.1} parent=1 // pred_fallthru
      _
    // Predicated region
    $region50: #{tpu_custom_call.1} parent=1 // pred_check
      _
    $region51: #{tpu_custom_call.1} parent=1 // pred_check_branch
      %472 = sbr.rel (0) target = $region53
    $region52: #{tpu_custom_call.1} parent=1 // pred_region
      _
    $region53: #{tpu_custom_call.1} parent=1 // pred_fallthru
      _
    // Predicated region
    $region54: #{tpu_custom_call.1} parent=1 // pred_check
      _
    $region55: #{tpu_custom_call.1} parent=1 // pred_check_branch
      %474 = sbr.rel (0) target = $region57
    $region56: #{tpu_custom_call.1} parent=1 // pred_region
      _
    $region57: #{tpu_custom_call.1} parent=1 // pred_fallthru
      _
    %475 = vsyncpa [#allocation3], 1

</llo_original>
